<compile_context>
chip_gen: v7x
topology: tpu7x:2x2x1
jax: 0.10.0
libtpu: 0.0.40
codegen_flags: <defaults>
</compile_context>

<pallas_src>
import jax
import jax.numpy as jnp
from jax.experimental import pallas as pl
from jax.experimental.pallas import tpu as pltpu

_LANE = 128
_ROW_TILE = 16  # bf16 packs 2 rows / sublane -> use 16-row granularity


def _round_up(x, m):
    return ((x + m - 1) // m) * m


# ----------------------------------------------------------------------------- kernel
def _mlp_kernel(x_ref, w1_ref, b1_ref, w2_ref, b2_ref, o_ref):
    # In-kernel f32 -> bf16 cast of the activation tile (VPU, hidden under DMA/MXU).
    x = x_ref[...].astype(jnp.bfloat16)
    # Layer 1: Linear — bf16 operands, f32 accumulation on the MXU.
    h = jnp.dot(x, w1_ref[...], preferred_element_type=jnp.float32)
    h = jnp.maximum(h + b1_ref[...], 0.0)          # bias + ReLU in f32 (VPU)
    # Dropout: identity in eval/inference mode.
    # TODO(synk): training-mode dropout (pltpu.prng_seed + pltpu.prng_random_bits mask).
    # Layer 2: Linear — bf16 operands again, f32 accumulation.
    out = jnp.dot(h.astype(jnp.bfloat16), w2_ref[...], preferred_element_type=jnp.float32)
    o_ref[...] = (out + b2_ref[...]).astype(o_ref.dtype)


# ----------------------------------------------------------------------------- hw info
def _tpu_generation():
    """Returns (num_tensorcores_per_chip, usable_vmem_bytes). Conservative fallbacks."""
    kind = ""
    try:
        kind = jax.devices()[0].device_kind.lower()
    except Exception:
        pass
    num_tc = 2 if "v7" in kind else 1            # v7x: 2 TCs/chip; v5e/v6e: 1

    vmem_cap = None
    try:
        info = pltpu.get_tpu_info()
        vmem_cap = getattr(info, "vmem_capacity_bytes", None)
    except Exception:
        vmem_cap = None
    if not vmem_cap:
        vmem_cap = (64 << 20) if "v7" in kind else (128 << 20)
    usable = int(vmem_cap * 3 // 4)              # headroom for compiler-internal scratch
    return num_tc, usable


def _choose_block_m(mp, num_tc):
    if num_tc >= 2:
        # v7x: split across the 2 TCs only when each per-TC tile stays >= 256 rows.
        if mp >= 512:
            return min(512, _round_up(pl.cdiv(mp, 2), _ROW_TILE))
        return mp
    # Single-TC (v5e/v6e): the grid is a serial loop; one big tile amortizes
    # the ~0.35 us/step overhead. Cap at 1024 rows for very large batches.
    return mp if mp <= 1024 else 1024


def _vmem_budget_bytes(block_m, in_dim, hp, nc):
    """Explicit VMEM plan, including the h intermediate and in-kernel bf16 copies."""
    f32, bf16 = 4, 2
    kl = _round_up(in_dim, _LANE)                # x lane-layout width in VMEM
    cl = _round_up(nc, _LANE)                    # output lane-layout width in VMEM
    x_tiles = 2 * block_m * kl * f32             # double-buffered f32 x tiles
    x_bf16 = block_m * kl * bf16                 # in-kernel bf16 cast copy of x
    h_f32 = block_m * hp * f32                   # first matmul result (+bias/ReLU)
    h_bf16 = block_m * hp * bf16                 # bf16 copy fed to the 2nd matmul
    out_f32 = block_m * cl * f32                 # 2nd matmul f32 result
    o_tiles = 2 * block_m * cl * f32             # double-buffered output tiles
    w1 = _round_up(in_dim, _ROW_TILE) * hp * bf16
    w2 = hp * cl * bf16
    bias = 8 * (hp + cl) * f32                   # (1, ...) tiles pad to 8 sublanes
    return x_tiles + x_bf16 + h_f32 + h_bf16 + out_f32 + o_tiles + w1 + w2 + bias


# ----------------------------------------------------------------------------- params
def prepare_linear_net_params(w1, b1, w2, b2):
    """One-time pad/cast of weights (do NOT redo this every forward call).

    w1: [in_dim, layer_size]   b1: [layer_size]
    w2: [layer_size, nbr_classes]  b2: [nbr_classes]
    The hidden dim is padded to a lane multiple (lane-dense h, fully-fed MXU K
    for the 2nd matmul); in_dim and nbr_classes stay unpadded (full-dim blocks).
    """
    in_dim, layer_size = w1.shape
    nbr_classes = w2.shape[1]
    hp = _round_up(layer_size, _LANE)
    w1p = jnp.pad(w1, ((0, 0), (0, hp - layer_size))).astype(jnp.bfloat16)
    b1p = jnp.pad(b1, (0, hp - layer_size)).astype(jnp.float32).reshape(1, hp)
    w2p = jnp.pad(w2, ((0, hp - layer_size), (0, 0))).astype(jnp.bfloat16)
    b2p = b2.astype(jnp.float32).reshape(1, nbr_classes)
    return dict(w1=w1p, b1=b1p, w2=w2p, b2=b2p,
                in_dim=in_dim, layer_size=layer_size, nbr_classes=nbr_classes, hp=hp)


# ----------------------------------------------------------------------------- forward
def linear_net_forward(x, params, *, block_m=None):
    """Fused LinearNet forward: Linear -> ReLU -> Dropout(eval) -> Linear.

    x: [..., in_dim] (f32 or bf16); returns f32 logits [..., nbr_classes].
    """
    orig_shape = x.shape
    if x.ndim != 2:
        x = x.reshape(-1, orig_shape[-1])
    M, in_dim = x.shape
    assert in_dim == params["in_dim"]
    hp, nc = params["hp"], params["nbr_classes"]

    num_tc, usable_vmem = _tpu_generation()

    mp = _round_up(M, _ROW_TILE)
    if block_m is None:
        block_m = _choose_block_m(mp, num_tc)
    block_m = min(_round_up(block_m, _ROW_TILE), mp)
    # Shrink the batch tile under the corrected (h-inclusive) VMEM budget.
    while _vmem_budget_bytes(block_m, in_dim, hp, nc) > usable_vmem and block_m > _ROW_TILE:
        block_m = max(_ROW_TILE, _round_up(block_m // 2, _ROW_TILE))
    mp = _round_up(mp, block_m)                  # never a partial trailing block
    # TODO(synk): add a K-tiling "arbitrary" grid axis (streamed W1/W2 + f32 VMEM
    # accumulator) when the resident weights approach ~half the VMEM plan (v7x).

    xin = x if mp == M else jnp.pad(x, ((0, mp - M), (0, 0)))

    vmem_bytes = _vmem_budget_bytes(block_m, in_dim, hp, nc)
    vmem_limit = int(min(usable_vmem, vmem_bytes + (16 << 20)))

    grid = (mp // block_m,)
    flops = 2 * mp * (in_dim * hp + hp * nc)
    bytes_accessed = (mp * in_dim * xin.dtype.itemsize      # x read
                      + in_dim * hp * 2 + hp * nc * 2        # bf16 weights
                      + (hp + nc) * 4                        # biases
                      + mp * nc * 4)                         # f32 logits write
    cost = pl.CostEstimate(flops=flops, transcendentals=0,
                           bytes_accessed=int(bytes_accessed))

    out = pl.pallas_call(
        _mlp_kernel,
        out_shape=jax.ShapeDtypeStruct((mp, nc), jnp.float32),
        grid_spec=pltpu.PrefetchScalarGridSpec(
            num_scalar_prefetch=0,
            grid=grid,
            in_specs=[
                pl.BlockSpec((block_m, in_dim), lambda i: (i, 0)),  # x tile (raw dtype, cast in-kernel)
                pl.BlockSpec((in_dim, hp), lambda i: (0, 0)),       # W1 (grid-invariant, resident)
                pl.BlockSpec((1, hp), lambda i: (0, 0)),            # b1
                pl.BlockSpec((hp, nc), lambda i: (0, 0)),           # W2 (grid-invariant, resident)
                pl.BlockSpec((1, nc), lambda i: (0, 0)),            # b2
            ],
            out_specs=pl.BlockSpec((block_m, nc), lambda i: (i, 0)),  # unpadded class dim
        ),
        compiler_params=pltpu.CompilerParams(
            # TODO(synk): verify megacore sharding on v7x; switch batch axis to
            # pltpu.CORE_PARALLEL if "parallel" does not split across the 2 TCs.
            dimension_semantics=("parallel",),
            vmem_limit_bytes=vmem_limit,
        ),
        cost_estimate=cost,
    )(xin, params["w1"], params["b1"], params["w2"], params["b2"])

    if mp != M:
        out = out[:M]
    if len(orig_shape) != 2:
        out = out.reshape(*orig_shape[:-1], nc)
    return out


# ----------------------------------------------------------------------------- init
def init_linear_params(key, in_features, out_features, dtype=jnp.float32):
    """PyTorch nn.Linear-style init (uniform +/- 1/sqrt(fan_in)); weight as [in, out]."""
    kw, kb = jax.random.split(key)
    bound = 1.0 / (in_features ** 0.5)
    w = jax.random.uniform(kw, (in_features, out_features), dtype, -bound, bound)
    b = jax.random.uniform(kb, (out_features,), dtype, -bound, bound)
    return w, b


if __name__ == "__main__":
    # Shapes consistent with the module: input_dim=32, layer_size=128, nbr_classes=10.
    batch = 64
    input_dim = 32
    layer_size = 128
    nbr_classes = 10

    root = jax.random.PRNGKey(0)
    kx, k1, k2 = jax.random.split(root, 3)

    x = jax.random.normal(kx, (batch, input_dim), jnp.float32)
    w1, b1 = init_linear_params(k1, input_dim, layer_size)
    w2, b2 = init_linear_params(k2, layer_size, nbr_classes)

    # One-time weight pad/cast (kept across forward calls).
    params = prepare_linear_net_params(w1, b1, w2, b2)

    logits = linear_net_forward(x, params)
    logits = jax.block_until_ready(logits)
    assert logits.shape == (batch, nbr_classes)
    assert logits.dtype == jnp.float32

    # Reference #1: same bf16-fed / f32-accumulated math in plain JAX (tight tolerance).
    xb, w1b, w2b = (t.astype(jnp.bfloat16) for t in (x, w1, w2))
    h = jnp.maximum(jnp.dot(xb, w1b, preferred_element_type=jnp.float32) + b1, 0.0)
    ref_bf16 = jnp.dot(h.astype(jnp.bfloat16), w2b, preferred_element_type=jnp.float32) + b2
    assert jnp.allclose(logits, ref_bf16, atol=1e-3, rtol=1e-3)

    # Reference #2: full-f32 PyTorch-equivalent forward (looser tolerance: bf16 MXU operands).
    ref_f32 = jnp.maximum(x @ w1 + b1, 0.0) @ w2 + b2
    assert jnp.allclose(logits, ref_f32, atol=1e-1, rtol=1e-2)

    print("KERNEL_OK")
</pallas_src>

<mosaic_0001>
module attributes {stable_mosaic.version = 11 : i64} {
  func.func @_mlp_kernel(%arg0: i32, %arg1: memref<64x32xf32, #tpu.memory_space<vmem>>, %arg2: memref<32x128xbf16, #tpu.memory_space<vmem>>, %arg3: memref<1x128xf32, #tpu.memory_space<vmem>>, %arg4: memref<128x10xbf16, #tpu.memory_space<vmem>>, %arg5: memref<1x10xf32, #tpu.memory_space<vmem>>, %arg6: memref<64x10xf32, #tpu.memory_space<vmem>>) attributes {dimension_semantics = [#tpu.dimension_semantics<parallel>], iteration_bounds = array<i64: 1>, scalar_prefetch = 0 : i64, scratch_operands = 0 : i64, tpu.core_type = #tpu.core_type<tc>, window_params = [{transform_indices = @transform_0, window_bounds = array<i64: 64, 32>}, {pipeline_mode = #tpu.pipeline_mode<synchronous>, transform_indices = @transform_1, window_bounds = array<i64: 32, 128>}, {pipeline_mode = #tpu.pipeline_mode<synchronous>, transform_indices = @transform_2, window_bounds = array<i64: 1, 128>}, {pipeline_mode = #tpu.pipeline_mode<synchronous>, transform_indices = @transform_3, window_bounds = array<i64: 128, 10>}, {pipeline_mode = #tpu.pipeline_mode<synchronous>, transform_indices = @transform_4, window_bounds = array<i64: 1, 10>}, {transform_indices = @transform_5, window_bounds = array<i64: 64, 10>}]} {
    %c0 = arith.constant 0 : index
    %c0_0 = arith.constant 0 : index
    %0 = vector.load %arg1[%c0, %c0_0] : memref<64x32xf32, #tpu.memory_space<vmem>>, vector<64x32xf32>
    %1 = arith.truncf %0 : vector<64x32xf32> to vector<64x32xbf16>
    %c0_1 = arith.constant 0 : index
    %c0_2 = arith.constant 0 : index
    %2 = vector.load %arg2[%c0_1, %c0_2] : memref<32x128xbf16, #tpu.memory_space<vmem>>, vector<32x128xbf16>
    %cst = arith.constant dense<0.000000e+00> : vector<64x128xf32>
    %3 = tpu.matmul %1, %2, %cst {dimension_numbers = #tpu.dot_dimension_numbers<[1], [0], [0], [1], [0, 0, 1, 1], [], []>} : vector<64x32xbf16>, vector<32x128xbf16>, vector<64x128xf32> -> vector<64x128xf32>
    %c0_3 = arith.constant 0 : index
    %c0_4 = arith.constant 0 : index
    %4 = vector.load %arg3[%c0_3, %c0_4] : memref<1x128xf32, #tpu.memory_space<vmem>>, vector<1x128xf32>
    %5 = vector.broadcast %4 : vector<1x128xf32> to vector<64x128xf32>
    %6 = arith.addf %3, %5 : vector<64x128xf32>
    %cst_5 = arith.constant 0.000000e+00 : f32
    %7 = vector.broadcast %cst_5 : f32 to vector<64x128xf32>
    %8 = arith.maximumf %6, %7 : vector<64x128xf32>
    %9 = arith.truncf %8 : vector<64x128xf32> to vector<64x128xbf16>
    %c0_6 = arith.constant 0 : index
    %c0_7 = arith.constant 0 : index
    %10 = vector.load %arg4[%c0_6, %c0_7] : memref<128x10xbf16, #tpu.memory_space<vmem>>, vector<128x10xbf16>
    %cst_8 = arith.constant dense<0.000000e+00> : vector<64x10xf32>
    %11 = tpu.matmul %9, %10, %cst_8 {dimension_numbers = #tpu.dot_dimension_numbers<[1], [0], [0], [1], [0, 0, 1, 1], [], []>} : vector<64x128xbf16>, vector<128x10xbf16>, vector<64x10xf32> -> vector<64x10xf32>
    %c0_9 = arith.constant 0 : index
    %c0_10 = arith.constant 0 : index
    %12 = vector.load %arg5[%c0_9, %c0_10] : memref<1x10xf32, #tpu.memory_space<vmem>>, vector<1x10xf32>
    %13 = vector.broadcast %12 : vector<1x10xf32> to vector<64x10xf32>
    %14 = arith.addf %11, %13 : vector<64x10xf32>
    %c0_11 = arith.constant 0 : index
    %c0_12 = arith.constant 0 : index
    %15 = vector.load %arg6[%c0_11, %c0_12] : memref<64x10xf32, #tpu.memory_space<vmem>>, vector<64x10xf32>
    tpu.vector_store %arg6[%c0_11, %c0_12], %14 {strides = array<i32>} : memref<64x10xf32, #tpu.memory_space<vmem>>, vector<64x10xf32>,
    return
  }
  func.func @transform_0(%arg0: i32) -> (i32, i32) {
    %c0_i32 = arith.constant 0 : i32
    %c0_i32_0 = arith.constant 0 : i32
    return %arg0, %c0_i32 : i32, i32
  }
  func.func @transform_1(%arg0: i32) -> (i32, i32) {
    %c0_i32 = arith.constant 0 : i32
    %c0_i32_0 = arith.constant 0 : i32
    %c0_i32_1 = arith.constant 0 : i32
    return %c0_i32, %c0_i32_0 : i32, i32
  }
  func.func @transform_2(%arg0: i32) -> (i32, i32) {
    %c0_i32 = arith.constant 0 : i32
    %c0_i32_0 = arith.constant 0 : i32
    %c0_i32_1 = arith.constant 0 : i32
    return %c0_i32, %c0_i32_0 : i32, i32
  }
  func.func @transform_3(%arg0: i32) -> (i32, i32) {
    %c0_i32 = arith.constant 0 : i32
    %c0_i32_0 = arith.constant 0 : i32
    %c0_i32_1 = arith.constant 0 : i32
    return %c0_i32, %c0_i32_0 : i32, i32
  }
  func.func @transform_4(%arg0: i32) -> (i32, i32) {
    %c0_i32 = arith.constant 0 : i32
    %c0_i32_0 = arith.constant 0 : i32
    %c0_i32_1 = arith.constant 0 : i32
    return %c0_i32, %c0_i32_0 : i32, i32
  }
  func.func @transform_5(%arg0: i32) -> (i32, i32) {
    %c0_i32 = arith.constant 0 : i32
    %c0_i32_0 = arith.constant 0 : i32
    return %arg0, %c0_i32 : i32, i32
  }
}

</mosaic_0001>

<llo_original>
// kernel: tpu_custom_call.1
$region0: #{tpu_custom_call.1}
  #allocation0 [shape = 'u32[]', space=smem, size = 0x4, offset = 0x4, fixed_abs, tag = 'smem constant byte address 0x4 - core index']
  #allocation1 [shape = 'u32[144,128]{1,0:T(1,128)}', space=vmem, size = 0x12000, scoped, tag = 'internal scratch']
  %s0 = inlined_call_operand.vmem [shape: f32[64,32], index: 0, kind: input, shape index: {}]
  %s1 = inlined_call_operand.vmem [shape: bf16[32,128], index: 1, kind: input, shape index: {}]
  %s2 = inlined_call_operand.vmem [shape: f32[1,128], index: 2, kind: input, shape index: {}]
  %s3 = inlined_call_operand.vmem [shape: bf16[128,10], index: 3, kind: input, shape index: {}]
  %s4 = inlined_call_operand.vmem [shape: f32[1,10], index: 4, kind: input, shape index: {}]
  %s5 = inlined_call_operand.vmem [shape: f32[64,10], index: 5, kind: output, shape index: {}]
  %s6 = sld [smem:[#allocation0]]
  $region30: #{tpu_custom_call.1} parent=0
    _
  %s8 = ssub.s32 1, %s6
  %s9 = scalar_select 0, %s8, %s6
  // Predicated region
  $region2: #{tpu_custom_call.1} parent=0 // pred_check
    _
  $region3: #{tpu_custom_call.1} parent=0 // pred_check_branch
    %11 = sbr.rel (0) target = $region5
  $region4: #{tpu_custom_call.1} parent=0 // pred_region
    _
  $region5: #{tpu_custom_call.1} parent=0 // pred_fallthru
    _
  // Predicated region
  $region6: #{tpu_custom_call.1} parent=0 // pred_check
    _
  $region7: #{tpu_custom_call.1} parent=0 // pred_check_branch
    %13 = sbr.rel (0) target = $region9
  $region8: #{tpu_custom_call.1} parent=0 // pred_region
    _
  $region9: #{tpu_custom_call.1} parent=0 // pred_fallthru
    _
  // Predicated region
  $region10: #{tpu_custom_call.1} parent=0 // pred_check
    _
  $region11: #{tpu_custom_call.1} parent=0 // pred_check_branch
    %15 = sbr.rel (0) target = $region13
  $region12: #{tpu_custom_call.1} parent=0 // pred_region
    _
  $region13: #{tpu_custom_call.1} parent=0 // pred_fallthru
    _
  // Predicated region
  $region14: #{tpu_custom_call.1} parent=0 // pred_check
    _
  $region15: #{tpu_custom_call.1} parent=0 // pred_check_branch
    %17 = sbr.rel (0) target = $region17
  $region16: #{tpu_custom_call.1} parent=0 // pred_region
    _
  $region17: #{tpu_custom_call.1} parent=0 // pred_fallthru
    _
  // Predicated region
  $region18: #{tpu_custom_call.1} parent=0 // pred_check
    _
  $region19: #{tpu_custom_call.1} parent=0 // pred_check_branch
    %19 = sbr.rel (0) target = $region21
  $region20: #{tpu_custom_call.1} parent=0 // pred_region
    _
  $region21: #{tpu_custom_call.1} parent=0 // pred_fallthru
    _
  %v21 = vld [vmem:[%s0] sm:$0xff]
  %v22 = vld [vmem:[%s0 + $0x8] sm:$0xff]
  %v23 = vld [vmem:[%s0 + $0x10] sm:$0xff]
  %v24 = vld [vmem:[%s0 + $0x18] sm:$0xff]
  %v25 = vld [vmem:[%s0 + $0x20] sm:$0xff]
  %v26 = vld [vmem:[%s0 + $0x28] sm:$0xff]
  %v27 = vld [vmem:[%s0 + $0x30] sm:$0xff]
  %v28 = vld [vmem:[%s0 + $0x38] sm:$0xff]
  %v29 = vpack.c.bf16 %v22, %v21
  %v30 = vpack.c.bf16 %v24, %v23
  %v31 = vpack.c.bf16 %v26, %v25
  %v32 = vpack.c.bf16 %v28, %v27
  %v33 = vld [vmem:[%s1] sm:$0xf]
  %v34 = vld [vmem:[%s1 + $0x4] sm:$0xf]
  %v35 = vld [vmem:[%s1 + $0x8] sm:$0xf]
  %v36 = vld [vmem:[%s1 + $0xc] sm:$0xf]
  %v37 = vld [vmem:[%s2] sm:$0x1]
  %v39 = vlaneseq
  %v40 = vshrl.u32 %v39, 7
  %v41 = vsub.s32 0, %v40
  %v42 = vrot.slane %v37, %v41
  %v48 = vunpack.c.l.b16 %v33
  %v49 = vunpack.c.l.b16 %v34
  %v50 = vunpack.c.l.b16 %v35
  %v51 = vunpack.c.l.b16 %v36
  %v52 = vpack.c.b16 %v49, %v48
  %v53 = vpack.c.b16 %v51, %v50
  %vm56 = vcmask 261120
  %v58 = vsel %vm56, %v29, 0
  %v61 = vsel %vm56, %v30, 0
  %v64 = vsel %vm56, %v31, 0
  %v67 = vsel %vm56, %v32, 0
  %69 = vmatprep.subr.bf16.mxu0 0
  %70 = vmatpush1.bf16.msra.mxu0 %v52
  %71 = vmatprep.subr.bf16.mxu0 0
  %72 = vmatpush1.bf16.msra.mxu0 %v53
  %73 = vmatprep.subr.bf16.mxu0 0
  %74 = vmatpush1.bf16.msra.mxu0 0
  %75 = vmatprep.subr.bf16.mxu0 0
  %76 = vmatpush1.bf16.msra.mxu0 0
  %77 = vmatprep.subr.bf16.mxu0 0
  %78 = vmatpush1.bf16.msra.mxu0 0
  %79 = vmatprep.subr.bf16.mxu0 0
  %80 = vmatpush1.bf16.msra.mxu0 0
  %81 = vmatprep.subr.bf16.mxu0 0
  %82 = vmatpush1.bf16.msra.mxu0 0
  %83 = vmatprep.subr.bf16.mxu0 0
  %84 = vmatpush1.bf16.msra.mxu0 0
  %85 = vmatprep.subr.bf16.mxu0 0
  %86 = vmatpush1.bf16.msra.mxu0 0
  %87 = vmatprep.subr.bf16.mxu0 0
  %88 = vmatpush1.bf16.msra.mxu0 0
  %89 = vmatprep.subr.bf16.mxu0 0
  %90 = vmatpush1.bf16.msra.mxu0 0
  %91 = vmatprep.subr.bf16.mxu0 0
  %92 = vmatpush1.bf16.msra.mxu0 0
  %93 = vmatprep.subr.bf16.mxu0 0
  %94 = vmatpush1.bf16.msra.mxu0 0
  %95 = vmatprep.subr.bf16.mxu0 0
  %96 = vmatpush1.bf16.msra.mxu0 0
  %97 = vmatprep.subr.bf16.mxu0 0
  %98 = vmatpush1.bf16.msra.mxu0 0
  %99 = vmatprep.subr.bf16.mxu0 0
  %100 = vmatpush1.bf16.msra.mxu0 0
  %101 = vmatprep.mubr.bf16.mxu0 0
  %102 = vmatmul.mubr.bf16.gmra.mrb[0].mxu0 %v58
  %v103 = vpop.f32.mrb[0].mxu0
  %v104 = vadd.f32 %v42, %v103
  %v105 = vpop.f32.mrb[0].mxu0
  %v106 = vpop.f32.mrb[0].mxu0
  %v107 = vadd.f32 %v42, %v106
  %v108 = vpop.f32.mrb[0].mxu0
  %109 = vmatprep.mubr.bf16.mxu0 0
  %110 = vmatmul.mubr.bf16.gmra.mrb[0].mxu0 %v61
  %v111 = vpop.f32.mrb[0].mxu0
  %v112 = vadd.f32 %v42, %v111
  %v113 = vpop.f32.mrb[0].mxu0
  %v114 = vpop.f32.mrb[0].mxu0
  %v115 = vadd.f32 %v42, %v114
  %v116 = vpop.f32.mrb[0].mxu0
  %117 = vmatprep.mubr.bf16.mxu0 0
  %118 = vmatmul.mubr.bf16.gmra.mrb[0].mxu0 %v64
  %v119 = vpop.f32.mrb[0].mxu0
  %v120 = vadd.f32 %v42, %v119
  %v121 = vpop.f32.mrb[0].mxu0
  %v122 = vpop.f32.mrb[0].mxu0
  %v123 = vadd.f32 %v42, %v122
  %v124 = vpop.f32.mrb[0].mxu0
  %125 = vmatprep.mubr.bf16.mxu0 0
  %126 = vmatmul.mubr.bf16.gmra.mrb[0].mxu0 %v67
  %v127 = vpop.f32.mrb[0].mxu0
  %v128 = vadd.f32 %v42, %v127
  %v129 = vpop.f32.mrb[0].mxu0
  %v130 = vpop.f32.mrb[0].mxu0
  %v131 = vadd.f32 %v42, %v130
  %v132 = vpop.f32.mrb[0].mxu0
  %133 = vdwg.mxu0
  %v134 = vmax.f32 %v104, 0.0
  %v135 = vmax.f32 %v107, 0.0
  %v136 = vmax.f32 %v112, 0.0
  %v137 = vmax.f32 %v115, 0.0
  %v138 = vmax.f32 %v120, 0.0
  %v139 = vmax.f32 %v123, 0.0
  %v140 = vmax.f32 %v128, 0.0
  %v141 = vmax.f32 %v131, 0.0
  %v142 = vpack.c.bf16 %v135, %v134
  %v143 = vpack.c.bf16 %v137, %v136
  %v144 = vpack.c.bf16 %v139, %v138
  %v145 = vpack.c.bf16 %v141, %v140
  %v146 = vld [vmem:[%s3] sm:$0xf]
  %v147 = vld [vmem:[%s3 + $0x4] sm:$0xf]
  %v148 = vld [vmem:[%s3 + $0x8] sm:$0xf]
  %v149 = vld [vmem:[%s3 + $0xc] sm:$0xf]
  %v150 = vld [vmem:[%s3 + $0x10] sm:$0xf]
  %v151 = vld [vmem:[%s3 + $0x14] sm:$0xf]
  %v152 = vld [vmem:[%s3 + $0x18] sm:$0xf]
  %v153 = vld [vmem:[%s3 + $0x1c] sm:$0xf]
  %v154 = vld [vmem:[%s3 + $0x20] sm:$0xf]
  %v155 = vld [vmem:[%s3 + $0x24] sm:$0xf]
  %v156 = vld [vmem:[%s3 + $0x28] sm:$0xf]
  %v157 = vld [vmem:[%s3 + $0x2c] sm:$0xf]
  %v158 = vld [vmem:[%s3 + $0x30] sm:$0xf]
  %v159 = vld [vmem:[%s3 + $0x34] sm:$0xf]
  %v160 = vld [vmem:[%s3 + $0x38] sm:$0xf]
  %v161 = vld [vmem:[%s3 + $0x3c] sm:$0xf]
  %v162 = vld [vmem:[%s4] sm:$0x1]
  %v164 = vlaneseq
  %v165 = vshrl.u32 %v164, 7
  %v166 = vsub.s32 0, %v165
  %v167 = vrot.slane %v162, %v166
  %v185 = vunpack.c.l.b16 %v146
  %v186 = vunpack.c.l.b16 %v147
  %v187 = vunpack.c.l.b16 %v148
  %v188 = vunpack.c.l.b16 %v149
  %v189 = vunpack.c.l.b16 %v150
  %v190 = vunpack.c.l.b16 %v151
  %v191 = vunpack.c.l.b16 %v152
  %v192 = vunpack.c.l.b16 %v153
  %v193 = vunpack.c.l.b16 %v154
  %v194 = vunpack.c.l.b16 %v155
  %v195 = vunpack.c.l.b16 %v156
  %v196 = vunpack.c.l.b16 %v157
  %v197 = vunpack.c.l.b16 %v158
  %v198 = vunpack.c.l.b16 %v159
  %v199 = vunpack.c.l.b16 %v160
  %v200 = vunpack.c.l.b16 %v161
  %v201 = vpack.c.b16 %v186, %v185
  %v202 = vpack.c.b16 %v188, %v187
  %v203 = vpack.c.b16 %v190, %v189
  %v204 = vpack.c.b16 %v192, %v191
  %v205 = vpack.c.b16 %v194, %v193
  %v206 = vpack.c.b16 %v196, %v195
  %v207 = vpack.c.b16 %v198, %v197
  %v208 = vpack.c.b16 %v200, %v199
  %217 = vmatprep.subr.bf16.mxu0 0
  %218 = vmatpush1.bf16.msra.mxu0 %v201
  %219 = vmatprep.subr.bf16.mxu0 0
  %220 = vmatpush1.bf16.msra.mxu0 %v202
  %221 = vmatprep.subr.bf16.mxu0 0
  %222 = vmatpush1.bf16.msra.mxu0 %v203
  %223 = vmatprep.subr.bf16.mxu0 0
  %224 = vmatpush1.bf16.msra.mxu0 %v204
  %225 = vmatprep.subr.bf16.mxu0 0
  %226 = vmatpush1.bf16.msra.mxu0 %v205
  %227 = vmatprep.subr.bf16.mxu0 0
  %228 = vmatpush1.bf16.msra.mxu0 %v206
  %229 = vmatprep.subr.bf16.mxu0 0
  %230 = vmatpush1.bf16.msra.mxu0 %v207
  %231 = vmatprep.subr.bf16.mxu0 0
  %232 = vmatpush1.bf16.msra.mxu0 %v208
  %233 = vmatprep.subr.bf16.mxu0 0
  %234 = vmatpush1.bf16.msra.mxu0 0
  %235 = vmatprep.subr.bf16.mxu0 0
  %236 = vmatpush1.bf16.msra.mxu0 0
  %237 = vmatprep.subr.bf16.mxu0 0
  %238 = vmatpush1.bf16.msra.mxu0 0
  %239 = vmatprep.subr.bf16.mxu0 0
  %240 = vmatpush1.bf16.msra.mxu0 0
  %241 = vmatprep.subr.bf16.mxu0 0
  %242 = vmatpush1.bf16.msra.mxu0 0
  %243 = vmatprep.subr.bf16.mxu0 0
  %244 = vmatpush1.bf16.msra.mxu0 0
  %245 = vmatprep.subr.bf16.mxu0 0
  %246 = vmatpush1.bf16.msra.mxu0 0
  %247 = vmatprep.subr.bf16.mxu0 0
  %248 = vmatpush1.bf16.msra.mxu0 0
  %249 = vmatprep.mubr.bf16.mxu0 0
  %250 = vmatmul.mubr.bf16.gmra.mrb[0].mxu0 %v142
  %v251 = vpop.f32.mrb[0].mxu0
  %v252 = vadd.f32 %v167, %v251
  %v253 = vpop.f32.mrb[0].mxu0
  %v254 = vpop.f32.mrb[0].mxu0
  %v255 = vadd.f32 %v167, %v254
  %v256 = vpop.f32.mrb[0].mxu0
  %257 = vmatprep.mubr.bf16.mxu0 0
  %258 = vmatmul.mubr.bf16.gmra.mrb[0].mxu0 %v143
  %v259 = vpop.f32.mrb[0].mxu0
  %v260 = vadd.f32 %v167, %v259
  %v261 = vpop.f32.mrb[0].mxu0
  %v262 = vpop.f32.mrb[0].mxu0
  %v263 = vadd.f32 %v167, %v262
  %v264 = vpop.f32.mrb[0].mxu0
  %265 = vmatprep.mubr.bf16.mxu0 0
  %266 = vmatmul.mubr.bf16.gmra.mrb[0].mxu0 %v144
  %v267 = vpop.f32.mrb[0].mxu0
  %v268 = vadd.f32 %v167, %v267
  %v269 = vpop.f32.mrb[0].mxu0
  %v270 = vpop.f32.mrb[0].mxu0
  %v271 = vadd.f32 %v167, %v270
  %v272 = vpop.f32.mrb[0].mxu0
  %273 = vmatprep.mubr.bf16.mxu0 0
  %274 = vmatmul.mubr.bf16.gmra.mrb[0].mxu0 %v145
  %v275 = vpop.f32.mrb[0].mxu0
  %v276 = vadd.f32 %v167, %v275
  %v277 = vpop.f32.mrb[0].mxu0
  %v278 = vpop.f32.mrb[0].mxu0
  %v279 = vadd.f32 %v167, %v278
  %v280 = vpop.f32.mrb[0].mxu0
  %281 = vdwg.mxu0
  %vm282 = vcmask 80896
  %283 = vst.msk [vmem:[%s5] sm:$0xff] %vm282, %v252
  %284 = vst.msk [vmem:[%s5 + $0x8] sm:$0xff] %vm282, %v255
  %285 = vst.msk [vmem:[%s5 + $0x10] sm:$0xff] %vm282, %v260
  %286 = vst.msk [vmem:[%s5 + $0x18] sm:$0xff] %vm282, %v263
  %287 = vst.msk [vmem:[%s5 + $0x20] sm:$0xff] %vm282, %v268
  %288 = vst.msk [vmem:[%s5 + $0x28] sm:$0xff] %vm282, %v271
  %289 = vst.msk [vmem:[%s5 + $0x30] sm:$0xff] %vm282, %v276
  %290 = vst.msk [vmem:[%s5 + $0x38] sm:$0xff] %vm282, %v279
  // Predicated region
  $region22: #{tpu_custom_call.1} parent=0 // pred_check
    _
  $region23: #{tpu_custom_call.1} parent=0 // pred_check_branch
    %292 = sbr.rel (0) target = $region25
  $region24: #{tpu_custom_call.1} parent=0 // pred_region
    _
  $region25: #{tpu_custom_call.1} parent=0 // pred_fallthru
    _
  // Predicated region
  $region26: #{tpu_custom_call.1} parent=0 // pred_check
    _
  $region27: #{tpu_custom_call.1} parent=0 // pred_check_branch
    %294 = sbr.rel (0) target = $region29
  $region28: #{tpu_custom_call.1} parent=0 // pred_region
    _
  $region29: #{tpu_custom_call.1} parent=0 // pred_fallthru
    _

</llo_original>
